<compile_context>
chip_gen: v5e
topology: v5e:2x2
jax: 0.10.0
libtpu: 0.0.40
codegen_flags: <defaults>
</compile_context>

<pallas_src>
import functools

import jax
import jax.numpy as jnp
from jax.experimental import pallas as pl
from jax.experimental.pallas import tpu as pltpu


_LANE = 128     # TPU lane width (last dim)
_SUBLANE = 8    # f32 sublane count (second-to-last dim)

_VMEM_CAP = None


def _round_up(v, m):
    return (v + m - 1) // m * m


def _vmem_capacity_bytes():
    """Physical VMEM of the current TPU generation (cached, with safe fallback)."""
    global _VMEM_CAP
    if _VMEM_CAP is None:
        try:
            _VMEM_CAP = int(pltpu.get_tpu_info().vmem_capacity_bytes)
        except Exception:
            _VMEM_CAP = 64 * 1024 * 1024   # conservative (v7x-sized) fallback
    return _VMEM_CAP


# ---------------------------------------------------------------------------
# VMEM working-set models (bytes).
# ---------------------------------------------------------------------------
def _vmem_resident(bm, Hp, Fp, x_bytes, o_bytes):
    return (2 * bm * Hp * x_bytes          # x tile, double-buffered
            + 2 * bm * Hp * o_bytes        # out tile, double-buffered
            + 2 * Hp * Fp * 2              # w1 + w2 resident, SINGLE-buffered bf16
            + (Fp + Hp) * 4                # biases (f32), single-buffered
            + bm * Hp * 2                  # in-kernel bf16 cast of x
            + bm * Fp * 4                  # ReLU intermediate (f32)
            + bm * Fp * 2)                 # bf16 copy of the intermediate


def _vmem_ftiled(bm, bf, Hp, x_bytes, o_bytes):
    return (2 * bm * Hp * x_bytes          # x tile, double-buffered
            + 2 * bm * Hp * o_bytes        # out tile, double-buffered
            + 2 * 2 * Hp * bf * 2          # streamed w1/w2 F-slices, double-buffered
            + 2 * bf * 4 + Hp * 4          # b1 slice (double-buffered) + b2
            + bm * Hp * 4                  # f32 accumulator scratch
            + bm * Hp * 2                  # in-kernel bf16 cast of x
            + bm * bf * 4 + bm * bf * 2)   # intermediate f32 + its bf16 copy


# ---------------------------------------------------------------------------
# Kernels.
# ---------------------------------------------------------------------------
def _ffn_kernel_resident(x_ref, w1_ref, b1_ref, w2_ref, b2_ref, o_ref):
    # x_ref: (bm, Hp)   w1_ref: (Hp, Fp) bf16   b1_ref: (1, Fp) f32
    # w2_ref: (Fp, Hp) bf16   b2_ref: (1, Hp) f32   o_ref: (bm, Hp)
    xb = x_ref[...].astype(jnp.bfloat16)
    h = jnp.dot(xb, w1_ref[...], preferred_element_type=jnp.float32)
    h = jnp.maximum(h + b1_ref[...], 0.0)          # bias + ReLU in f32
    # TODO(synk): dropout omitted (identity in eval mode).
    y = jnp.dot(h.astype(jnp.bfloat16), w2_ref[...],
                preferred_element_type=jnp.float32)
    o_ref[...] = (y + b2_ref[...]).astype(o_ref.dtype)


def _ffn_kernel_ftiled(x_ref, w1_ref, b1_ref, w2_ref, b2_ref, o_ref, acc_ref):
    # Streams (Hp, bf) / (bf, Hp) weight slices over the "arbitrary" F axis and
    # accumulates the second matmul in an f32 scratch.
    f = pl.program_id(1)

    @pl.when(f == 0)
    def _():
        acc_ref[...] = jnp.zeros_like(acc_ref)

    xb = x_ref[...].astype(jnp.bfloat16)
    h = jnp.dot(xb, w1_ref[...], preferred_element_type=jnp.float32)
    h = jnp.maximum(h + b1_ref[...], 0.0)
    # TODO(synk): dropout omitted (identity in eval mode).
    acc_ref[...] += jnp.dot(h.astype(jnp.bfloat16), w2_ref[...],
                            preferred_element_type=jnp.float32)

    @pl.when(f == pl.num_programs(1) - 1)
    def _():
        o_ref[...] = (acc_ref[...] + b2_ref[...]).astype(o_ref.dtype)


# ---------------------------------------------------------------------------
# Wrapper.
# ---------------------------------------------------------------------------
@functools.partial(jax.jit, static_argnames=("block_m",))
def ffn_forward(x, w1, b1, w2, b2, *, block_m=1024):
    """x: [B, S, H] -> [B, S, H].  Weights stored as (in_dim, out_dim)."""
    B, S, H = x.shape
    F_ = w1.shape[1]
    M = B * S

    x_bytes = jnp.dtype(x.dtype).itemsize
    out_dtype = x.dtype                      # bf16 in -> bf16 out (half writeback)
    o_bytes = jnp.dtype(out_dtype).itemsize

    cap = _vmem_capacity_bytes()
    budget = (cap * 3) // 4                  # working-set budget (compiler headroom)
    vmem_limit = (cap * 9) // 10             # scoped VMEM limit, above the budget

    # Feature dims padded to the 128-lane width (lane-dense blocks, full MXU tiles).
    # Zero padding is exact: padded weight rows/cols and bias entries are zero.
    Hp = _round_up(H, _LANE)
    Fp = _round_up(F_, _LANE)

    bm_cap = min(block_m, _round_up(M, _SUBLANE))
    bm_floor = max(_SUBLANE, min(256, _round_up(M, _SUBLANE)))

    resident = _vmem_resident(bm_floor, Hp, Fp, x_bytes, o_bytes) <= budget

    if resident:
        # Both weight matrices stay VMEM-resident; grow the token tile.
        bm = bm_cap
        while bm > bm_floor and _vmem_resident(bm, Hp, Fp, x_bytes, o_bytes) > budget:
            bm = max(bm_floor, _round_up(bm // 2, _SUBLANE))
        bf = Fp
    else:
        # Weight-streaming fallback (large H*F, most relevant on v7x's 64 MiB VMEM).
        bf = _LANE
        bm = bm_cap
        while bm > bm_floor and _vmem_ftiled(bm, bf, Hp, x_bytes, o_bytes) > budget:
            bm = max(bm_floor, _round_up(bm // 2, _SUBLANE))
        while bf * 2 <= Fp and _vmem_ftiled(bm, bf * 2, Hp, x_bytes, o_bytes) <= budget:
            bf *= 2
        Fp = _round_up(F_, bf)               # keep the F grid exactly divisible

    # Prefer >= 2 M-steps so both of v7x's TensorCores get work (no-op on 1-TC chips,
    # skipped for small problems where it would only add per-step overhead).
    if M >= 512:
        while _round_up(M, bm) // bm < 2 and bm > 256:
            bm = _round_up(bm // 2, _SUBLANE)

    Mp = _round_up(M, bm)
    grid_m = Mp // bm
    n_f = Fp // bf

    # --- Wrapper-side padding: only when actually required (no extra HBM passes
    # in the aligned case).  x keeps its native dtype; the bf16 cast is in-kernel.
    x2d = x.reshape(M, H)
    if (Mp, Hp) != (M, H):
        x2d = jnp.pad(x2d, ((0, Mp - M), (0, Hp - H)))
    w1p = w1 if (Hp, Fp) == (H, F_) else jnp.pad(w1, ((0, Hp - H), (0, Fp - F_)))
    w2p = w2 if (Fp, Hp) == (F_, H) else jnp.pad(w2, ((0, Fp - F_), (0, Hp - H)))
    w1p = w1p.astype(jnp.bfloat16)           # half the weight DMA + 2x MXU rate
    w2p = w2p.astype(jnp.bfloat16)
    b1p = (b1 if Fp == F_ else jnp.pad(b1, (0, Fp - F_))).reshape(1, Fp).astype(jnp.float32)
    b2p = (b2 if Hp == H else jnp.pad(b2, (0, Hp - H))).reshape(1, Hp).astype(jnp.float32)

    weight_bytes = 2 * Hp * Fp * 2 * (1 if n_f == 1 else grid_m)
    cost = pl.CostEstimate(
        flops=int(4 * Mp * Hp * Fp),
        transcendentals=0,
        bytes_accessed=int(Mp * Hp * (x_bytes + o_bytes) + weight_bytes + (Fp + Hp) * 4),
    )

    if n_f == 1:
        resident_mode = pl.Buffered(1)       # constant index_map -> no re-fetch
        kernel = _ffn_kernel_resident
        grid = (grid_m,)
        in_specs = [
            pl.BlockSpec((bm, Hp), lambda i: (i, 0)),                              # x
            pl.BlockSpec((Hp, Fp), lambda i: (0, 0), pipeline_mode=resident_mode),  # w1
            pl.BlockSpec((1, Fp), lambda i: (0, 0), pipeline_mode=resident_mode),   # b1
            pl.BlockSpec((Fp, Hp), lambda i: (0, 0), pipeline_mode=resident_mode),  # w2
            pl.BlockSpec((1, Hp), lambda i: (0, 0), pipeline_mode=resident_mode),   # b2
        ]
        out_spec = pl.BlockSpec((bm, Hp), lambda i: (i, 0))
        scratch = []
        dim_sem = ("parallel",)
    else:
        kernel = _ffn_kernel_ftiled
        grid = (grid_m, n_f)                 # reduction (F) axis last
        in_specs = [
            pl.BlockSpec((bm, Hp), lambda i, f: (i, 0)),                            # x
            pl.BlockSpec((Hp, bf), lambda i, f: (0, f)),                            # w1 slice
            pl.BlockSpec((1, bf), lambda i, f: (0, f)),                             # b1 slice
            pl.BlockSpec((bf, Hp), lambda i, f: (f, 0)),                            # w2 slice
            pl.BlockSpec((1, Hp), lambda i, f: (0, 0), pipeline_mode=pl.Buffered(1)),  # b2
        ]
        out_spec = pl.BlockSpec((bm, Hp), lambda i, f: (i, 0))
        scratch = [pltpu.VMEM((bm, Hp), jnp.float32)]
        dim_sem = ("parallel", "arbitrary")

    out = pl.pallas_call(
        kernel,
        out_shape=jax.ShapeDtypeStruct((Mp, Hp), out_dtype),
        grid_spec=pltpu.PrefetchScalarGridSpec(
            num_scalar_prefetch=0,
            grid=grid,
            in_specs=in_specs,
            out_specs=out_spec,
            scratch_shapes=scratch,
        ),
        compiler_params=pltpu.CompilerParams(
            dimension_semantics=dim_sem,
            vmem_limit_bytes=vmem_limit,
        ),
        cost_estimate=cost,
    )(x2d, w1p, b1p, w2p, b2p)

    if (Mp, Hp) != (M, H):
        out = out[:M, :H]
    return out.reshape(B, S, H)


if __name__ == "__main__":
    # opt = {'hidden_size': 32, 'ffn_size': 64, 'dropout': 0.1}
    hidden_size = 32
    ffn_size = 64
    batch, seq = 2, 8

    key = jax.random.PRNGKey(0)
    kx, kw1, kb1, kw2, kb2 = jax.random.split(key, 5)

    x = jax.random.normal(kx, (batch, seq, hidden_size), dtype=jnp.float32)

    # Deterministic parameter init (Kaiming-uniform-like bounds as in torch Linear).
    bound1 = 1.0 / (hidden_size ** 0.5)
    w1 = jax.random.uniform(kw1, (hidden_size, ffn_size), jnp.float32,
                            minval=-bound1, maxval=bound1)
    b1 = jax.random.uniform(kb1, (ffn_size,), jnp.float32,
                            minval=-bound1, maxval=bound1)
    bound2 = 1.0 / (ffn_size ** 0.5)
    w2 = jax.random.uniform(kw2, (ffn_size, hidden_size), jnp.float32,
                            minval=-bound2, maxval=bound2)
    b2 = jax.random.uniform(kb2, (hidden_size,), jnp.float32,
                            minval=-bound2, maxval=bound2)

    y = ffn_forward(x, w1, b1, w2, b2)
    jax.block_until_ready(y)

    x2 = x.reshape(-1, hidden_size)

    # Reference 1: emulate the kernel arithmetic (bf16 matmul inputs, f32 accum)
    # -> tight tolerance.  Note: bf16 is an inference-precision choice, not exact
    # parity with the f32 PyTorch module.
    xb = x2.astype(jnp.bfloat16).astype(jnp.float32)
    w1b = w1.astype(jnp.bfloat16).astype(jnp.float32)
    w2b = w2.astype(jnp.bfloat16).astype(jnp.float32)
    h_ref = jnp.maximum(xb @ w1b + b1, 0.0)
    ref_bf16 = (h_ref.astype(jnp.bfloat16).astype(jnp.float32) @ w2b + b2)
    ref_bf16 = ref_bf16.reshape(batch, seq, hidden_size)
    assert jnp.allclose(y, ref_bf16, atol=1e-4, rtol=1e-4), \
        "mismatch vs bf16-matmul reference"

    # Reference 2: full-f32 module semantics -> bf16-level tolerance.
    ref_f32 = (jnp.maximum(x2 @ w1 + b1, 0.0) @ w2 + b2)
    ref_f32 = ref_f32.reshape(batch, seq, hidden_size)
    assert jnp.allclose(y, ref_f32, atol=3e-2, rtol=3e-2), \
        "mismatch vs f32 reference"

    print("KERNEL_OK")
</pallas_src>

<mosaic_0001>
module attributes {stable_mosaic.version = 11 : i64} {
  func.func @_ffn_kernel_resident(%arg0: i32, %arg1: memref<16x128xf32, #tpu.memory_space<vmem>>, %arg2: memref<128x128xbf16, #tpu.memory_space<vmem>>, %arg3: memref<1x128xf32, #tpu.memory_space<vmem>>, %arg4: memref<128x128xbf16, #tpu.memory_space<vmem>>, %arg5: memref<1x128xf32, #tpu.memory_space<vmem>>, %arg6: memref<16x128xf32, #tpu.memory_space<vmem>>) attributes {dimension_semantics = [#tpu.dimension_semantics<parallel>], iteration_bounds = array<i64: 1>, scalar_prefetch = 0 : i64, scratch_operands = 0 : i64, tpu.core_type = #tpu.core_type<tc>, window_params = [{transform_indices = @transform_0, window_bounds = array<i64: 16, 128>}, {pipeline_mode = #tpu.pipeline_mode<synchronous>, transform_indices = @transform_1, window_bounds = array<i64: 128, 128>}, {pipeline_mode = #tpu.pipeline_mode<synchronous>, transform_indices = @transform_2, window_bounds = array<i64: 1, 128>}, {pipeline_mode = #tpu.pipeline_mode<synchronous>, transform_indices = @transform_3, window_bounds = array<i64: 128, 128>}, {pipeline_mode = #tpu.pipeline_mode<synchronous>, transform_indices = @transform_4, window_bounds = array<i64: 1, 128>}, {transform_indices = @transform_5, window_bounds = array<i64: 16, 128>}]} {
    %c0 = arith.constant 0 : index
    %c0_0 = arith.constant 0 : index
    %0 = vector.load %arg1[%c0, %c0_0] : memref<16x128xf32, #tpu.memory_space<vmem>>, vector<16x128xf32>
    %1 = arith.truncf %0 : vector<16x128xf32> to vector<16x128xbf16>
    %c0_1 = arith.constant 0 : index
    %c0_2 = arith.constant 0 : index
    %2 = vector.load %arg2[%c0_1, %c0_2] : memref<128x128xbf16, #tpu.memory_space<vmem>>, vector<128x128xbf16>
    %cst = arith.constant dense<0.000000e+00> : vector<16x128xf32>
    %3 = tpu.matmul %1, %2, %cst {dimension_numbers = #tpu.dot_dimension_numbers<[1], [0], [0], [1], [0, 0, 1, 1], [], []>} : vector<16x128xbf16>, vector<128x128xbf16>, vector<16x128xf32> -> vector<16x128xf32>
    %c0_3 = arith.constant 0 : index
    %c0_4 = arith.constant 0 : index
    %4 = vector.load %arg3[%c0_3, %c0_4] : memref<1x128xf32, #tpu.memory_space<vmem>>, vector<1x128xf32>
    %5 = vector.broadcast %4 : vector<1x128xf32> to vector<16x128xf32>
    %6 = arith.addf %3, %5 : vector<16x128xf32>
    %cst_5 = arith.constant 0.000000e+00 : f32
    %7 = vector.broadcast %cst_5 : f32 to vector<16x128xf32>
    %8 = arith.maximumf %6, %7 : vector<16x128xf32>
    %9 = arith.truncf %8 : vector<16x128xf32> to vector<16x128xbf16>
    %c0_6 = arith.constant 0 : index
    %c0_7 = arith.constant 0 : index
    %10 = vector.load %arg4[%c0_6, %c0_7] : memref<128x128xbf16, #tpu.memory_space<vmem>>, vector<128x128xbf16>
    %cst_8 = arith.constant dense<0.000000e+00> : vector<16x128xf32>
    %11 = tpu.matmul %9, %10, %cst_8 {dimension_numbers = #tpu.dot_dimension_numbers<[1], [0], [0], [1], [0, 0, 1, 1], [], []>} : vector<16x128xbf16>, vector<128x128xbf16>, vector<16x128xf32> -> vector<16x128xf32>
    %c0_9 = arith.constant 0 : index
    %c0_10 = arith.constant 0 : index
    %12 = vector.load %arg5[%c0_9, %c0_10] : memref<1x128xf32, #tpu.memory_space<vmem>>, vector<1x128xf32>
    %13 = vector.broadcast %12 : vector<1x128xf32> to vector<16x128xf32>
    %14 = arith.addf %11, %13 : vector<16x128xf32>
    %c0_11 = arith.constant 0 : index
    %c0_12 = arith.constant 0 : index
    %15 = vector.load %arg6[%c0_11, %c0_12] : memref<16x128xf32, #tpu.memory_space<vmem>>, vector<16x128xf32>
    tpu.vector_store %arg6[%c0_11, %c0_12], %14 {strides = array<i32>} : memref<16x128xf32, #tpu.memory_space<vmem>>, vector<16x128xf32>,
    return
  }
  func.func @transform_0(%arg0: i32) -> (i32, i32) {
    %c0_i32 = arith.constant 0 : i32
    %c0_i32_0 = arith.constant 0 : i32
    return %arg0, %c0_i32 : i32, i32
  }
  func.func @transform_1(%arg0: i32) -> (i32, i32) {
    %c0_i32 = arith.constant 0 : i32
    %c0_i32_0 = arith.constant 0 : i32
    %c0_i32_1 = arith.constant 0 : i32
    return %c0_i32, %c0_i32_0 : i32, i32
  }
  func.func @transform_2(%arg0: i32) -> (i32, i32) {
    %c0_i32 = arith.constant 0 : i32
    %c0_i32_0 = arith.constant 0 : i32
    %c0_i32_1 = arith.constant 0 : i32
    return %c0_i32, %c0_i32_0 : i32, i32
  }
  func.func @transform_3(%arg0: i32) -> (i32, i32) {
    %c0_i32 = arith.constant 0 : i32
    %c0_i32_0 = arith.constant 0 : i32
    %c0_i32_1 = arith.constant 0 : i32
    return %c0_i32, %c0_i32_0 : i32, i32
  }
  func.func @transform_4(%arg0: i32) -> (i32, i32) {
    %c0_i32 = arith.constant 0 : i32
    %c0_i32_0 = arith.constant 0 : i32
    %c0_i32_1 = arith.constant 0 : i32
    return %c0_i32, %c0_i32_0 : i32, i32
  }
  func.func @transform_5(%arg0: i32) -> (i32, i32) {
    %c0_i32 = arith.constant 0 : i32
    %c0_i32_0 = arith.constant 0 : i32
    return %arg0, %c0_i32 : i32, i32
  }
}

</mosaic_0001>

<llo_original>
// kernel: ffn_forward.1
$region0: #{ffn_forward.1}
  #allocation0 [shape = 'u32[]', space=smem, size = 0x4, offset = 0x4, fixed_abs, tag = 'smem constant byte address 0x4 - core index']
  #allocation1 [shape = 'u32[72,128]{1,0:T(1,128)}', space=vmem, size = 0x9000, scoped, tag = 'internal scratch']
  %s0 = inlined_call_operand.vmem [shape: f32[16,128], index: 0, kind: input, shape index: {}]
  %s1 = inlined_call_operand.vmem [shape: bf16[128,128], index: 1, kind: input, shape index: {}]
  %s2 = inlined_call_operand.vmem [shape: f32[1,128], index: 2, kind: input, shape index: {}]
  %s3 = inlined_call_operand.vmem [shape: bf16[128,128], index: 3, kind: input, shape index: {}]
  %s4 = inlined_call_operand.vmem [shape: f32[1,128], index: 4, kind: input, shape index: {}]
  %s5 = inlined_call_operand.vmem [shape: f32[16,128], index: 5, kind: output, shape index: {}]
  %s6 = sld [smem:[#allocation0]]
  $region30: #{ffn_forward.1} parent=0
    _
  %s8 = ssub.s32 1, %s6
  %s9 = scalar_select 0, %s8, %s6
  // Predicated region
  $region2: #{ffn_forward.1} parent=0 // pred_check
    _
  $region3: #{ffn_forward.1} parent=0 // pred_check_branch
    %11 = sbr.rel (0) target = $region5
  $region4: #{ffn_forward.1} parent=0 // pred_region
    _
  $region5: #{ffn_forward.1} parent=0 // pred_fallthru
    _
  // Predicated region
  $region6: #{ffn_forward.1} parent=0 // pred_check
    _
  $region7: #{ffn_forward.1} parent=0 // pred_check_branch
    %13 = sbr.rel (0) target = $region9
  $region8: #{ffn_forward.1} parent=0 // pred_region
    _
  $region9: #{ffn_forward.1} parent=0 // pred_fallthru
    _
  // Predicated region
  $region10: #{ffn_forward.1} parent=0 // pred_check
    _
  $region11: #{ffn_forward.1} parent=0 // pred_check_branch
    %15 = sbr.rel (0) target = $region13
  $region12: #{ffn_forward.1} parent=0 // pred_region
    _
  $region13: #{ffn_forward.1} parent=0 // pred_fallthru
    _
  // Predicated region
  $region14: #{ffn_forward.1} parent=0 // pred_check
    _
  $region15: #{ffn_forward.1} parent=0 // pred_check_branch
    %17 = sbr.rel (0) target = $region17
  $region16: #{ffn_forward.1} parent=0 // pred_region
    _
  $region17: #{ffn_forward.1} parent=0 // pred_fallthru
    _
  // Predicated region
  $region18: #{ffn_forward.1} parent=0 // pred_check
    _
  $region19: #{ffn_forward.1} parent=0 // pred_check_branch
    %19 = sbr.rel (0) target = $region21
  $region20: #{ffn_forward.1} parent=0 // pred_region
    _
  $region21: #{ffn_forward.1} parent=0 // pred_fallthru
    _
  %v20 = vld [vmem:[%s0] sm:$0xff]
  %v21 = vld [vmem:[%s0 + $0x8] sm:$0xff]
  %v22 = vpack.c.bf16 %v21, %v20
  %v23 = vld [vmem:[%s1] sm:$0xf]
  %v24 = vld [vmem:[%s1 + $0x4] sm:$0xf]
  %v25 = vld [vmem:[%s1 + $0x8] sm:$0xf]
  %v26 = vld [vmem:[%s1 + $0xc] sm:$0xf]
  %v27 = vld [vmem:[%s1 + $0x10] sm:$0xf]
  %v28 = vld [vmem:[%s1 + $0x14] sm:$0xf]
  %v29 = vld [vmem:[%s1 + $0x18] sm:$0xf]
  %v30 = vld [vmem:[%s1 + $0x1c] sm:$0xf]
  %v31 = vld [vmem:[%s1 + $0x20] sm:$0xf]
  %v32 = vld [vmem:[%s1 + $0x24] sm:$0xf]
  %v33 = vld [vmem:[%s1 + $0x28] sm:$0xf]
  %v34 = vld [vmem:[%s1 + $0x2c] sm:$0xf]
  %v35 = vld [vmem:[%s1 + $0x30] sm:$0xf]
  %v36 = vld [vmem:[%s1 + $0x34] sm:$0xf]
  %v37 = vld [vmem:[%s1 + $0x38] sm:$0xf]
  %v38 = vld [vmem:[%s1 + $0x3c] sm:$0xf]
  %v39 = vld [vmem:[%s2] sm:$0x1]
  %v41 = vperm.slane %v39, 0
  %v59 = vunpack.c.l.b16 %v23
  %v60 = vunpack.c.l.b16 %v24
  %v61 = vunpack.c.l.b16 %v25
  %v62 = vunpack.c.l.b16 %v26
  %v63 = vunpack.c.l.b16 %v27
  %v64 = vunpack.c.l.b16 %v28
  %v65 = vunpack.c.l.b16 %v29
  %v66 = vunpack.c.l.b16 %v30
  %v67 = vunpack.c.l.b16 %v31
  %v68 = vunpack.c.l.b16 %v32
  %v69 = vunpack.c.l.b16 %v33
  %v70 = vunpack.c.l.b16 %v34
  %v71 = vunpack.c.l.b16 %v35
  %v72 = vunpack.c.l.b16 %v36
  %v73 = vunpack.c.l.b16 %v37
  %v74 = vunpack.c.l.b16 %v38
  %v75 = vpack.c.b16 %v60, %v59
  %v76 = vpack.c.b16 %v62, %v61
  %v77 = vpack.c.b16 %v64, %v63
  %v78 = vpack.c.b16 %v66, %v65
  %v79 = vpack.c.b16 %v68, %v67
  %v80 = vpack.c.b16 %v70, %v69
  %v81 = vpack.c.b16 %v72, %v71
  %v82 = vpack.c.b16 %v74, %v73
  %91 = vmatpush.bf16.msra.mxu0 %v82
  %92 = vmatpush.bf16.msra.mxu0 %v81
  %93 = vmatpush.bf16.msra.mxu0 %v80
  %94 = vmatpush.bf16.msra.mxu0 %v79
  %95 = vmatpush.bf16.msra.mxu0 %v78
  %96 = vmatpush.bf16.msra.mxu0 %v77
  %97 = vmatpush.bf16.msra.mxu0 %v76
  %98 = vmatpush.bf16.msra.mxu0 %v75
  %99 = vmatmul.bf16.gmra.mxu0 %v22
  %v100 = vpop.f32.mrf.mxu0
  %v101 = vadd.f32 %v41, %v100
  %v102 = vpop.f32.mrf.mxu0
  %v103 = vadd.f32 %v41, %v102
  %104 = vdwg.mxu0
  %v105 = vmax.f32 %v101, 0.0
  %v106 = vmax.f32 %v103, 0.0
  %v107 = vpack.c.bf16 %v106, %v105
  %v108 = vld [vmem:[%s3] sm:$0xf]
  %v109 = vld [vmem:[%s3 + $0x4] sm:$0xf]
  %v110 = vld [vmem:[%s3 + $0x8] sm:$0xf]
  %v111 = vld [vmem:[%s3 + $0xc] sm:$0xf]
  %v112 = vld [vmem:[%s3 + $0x10] sm:$0xf]
  %v113 = vld [vmem:[%s3 + $0x14] sm:$0xf]
  %v114 = vld [vmem:[%s3 + $0x18] sm:$0xf]
  %v115 = vld [vmem:[%s3 + $0x1c] sm:$0xf]
  %v116 = vld [vmem:[%s3 + $0x20] sm:$0xf]
  %v117 = vld [vmem:[%s3 + $0x24] sm:$0xf]
  %v118 = vld [vmem:[%s3 + $0x28] sm:$0xf]
  %v119 = vld [vmem:[%s3 + $0x2c] sm:$0xf]
  %v120 = vld [vmem:[%s3 + $0x30] sm:$0xf]
  %v121 = vld [vmem:[%s3 + $0x34] sm:$0xf]
  %v122 = vld [vmem:[%s3 + $0x38] sm:$0xf]
  %v123 = vld [vmem:[%s3 + $0x3c] sm:$0xf]
  %v124 = vld [vmem:[%s4] sm:$0x1]
  %v126 = vperm.slane %v124, 0
  %v144 = vunpack.c.l.b16 %v108
  %v145 = vunpack.c.l.b16 %v109
  %v146 = vunpack.c.l.b16 %v110
  %v147 = vunpack.c.l.b16 %v111
  %v148 = vunpack.c.l.b16 %v112
  %v149 = vunpack.c.l.b16 %v113
  %v150 = vunpack.c.l.b16 %v114
  %v151 = vunpack.c.l.b16 %v115
  %v152 = vunpack.c.l.b16 %v116
  %v153 = vunpack.c.l.b16 %v117
  %v154 = vunpack.c.l.b16 %v118
  %v155 = vunpack.c.l.b16 %v119
  %v156 = vunpack.c.l.b16 %v120
  %v157 = vunpack.c.l.b16 %v121
  %v158 = vunpack.c.l.b16 %v122
  %v159 = vunpack.c.l.b16 %v123
  %v160 = vpack.c.b16 %v145, %v144
  %v161 = vpack.c.b16 %v147, %v146
  %v162 = vpack.c.b16 %v149, %v148
  %v163 = vpack.c.b16 %v151, %v150
  %v164 = vpack.c.b16 %v153, %v152
  %v165 = vpack.c.b16 %v155, %v154
  %v166 = vpack.c.b16 %v157, %v156
  %v167 = vpack.c.b16 %v159, %v158
  %176 = vmatpush.bf16.msra.mxu0 %v167
  %177 = vmatpush.bf16.msra.mxu0 %v166
  %178 = vmatpush.bf16.msra.mxu0 %v165
  %179 = vmatpush.bf16.msra.mxu0 %v164
  %180 = vmatpush.bf16.msra.mxu0 %v163
  %181 = vmatpush.bf16.msra.mxu0 %v162
  %182 = vmatpush.bf16.msra.mxu0 %v161
  %183 = vmatpush.bf16.msra.mxu0 %v160
  %184 = vmatmul.bf16.gmra.mxu0 %v107
  %v185 = vpop.f32.mrf.mxu0
  %v186 = vadd.f32 %v126, %v185
  %v187 = vpop.f32.mrf.mxu0
  %v188 = vadd.f32 %v126, %v187
  %189 = vdwg.mxu0
  %190 = vst [vmem:[%s5] sm:$0xff] %v186
  %191 = vst [vmem:[%s5 + $0x8] sm:$0xff] %v188
  // Predicated region
  $region22: #{ffn_forward.1} parent=0 // pred_check
    _
  $region23: #{ffn_forward.1} parent=0 // pred_check_branch
    %193 = sbr.rel (0) target = $region25
  $region24: #{ffn_forward.1} parent=0 // pred_region
    _
  $region25: #{ffn_forward.1} parent=0 // pred_fallthru
    _
  // Predicated region
  $region26: #{ffn_forward.1} parent=0 // pred_check
    _
  $region27: #{ffn_forward.1} parent=0 // pred_check_branch
    %195 = sbr.rel (0) target = $region29
  $region28: #{ffn_forward.1} parent=0 // pred_region
    _
  $region29: #{ffn_forward.1} parent=0 // pred_fallthru
    _

</llo_original>
